<compile_context>
chip_gen: v7x
topology: tpu7x:2x2x1
jax: 0.10.0
libtpu: 0.0.40
codegen_flags: <defaults>
</compile_context>

<pallas_src>
import functools
import re

import jax
import jax.numpy as jnp
from jax.experimental import pallas as pl
from jax.experimental.pallas import tpu as pltpu

DIM = 128
HIDDEN = 4 * DIM          # 512
FUSED = 2 * HIDDEN        # 1024  ([w1^T | w3^T] concatenated on the output axis)


def _round_up(x, m):
    return (x + m - 1) // m * m


def _tpu_generation():
    """Best-effort TPU generation from device_kind; defaults to 6 (bf16 gating)."""
    try:
        kind = jax.devices()[0].device_kind.lower()
    except Exception:
        return 6
    m = re.search(r"(\d+)", kind)
    return int(m.group(1)) if m else 6


def _choose_tm(M, tm_max):
    """Row tile: multiple of 8 (sublane), >=2 grid steps when M allows (v7x megacore),
    multiples of 256 once the MXU can be filled, capped at tm_max."""
    m8 = _round_up(max(M, 1), 8)
    if m8 <= 8:
        return 8
    if m8 <= 512:
        return _round_up(pl.cdiv(m8, 2), 8)
    if m8 <= 2 * tm_max:
        return _round_up(pl.cdiv(m8, 2), 256)
    return tm_max


def swiglu_kernel(x_ref, w13_ref, w2_ref, o_ref, *, gate_bf16, hidden_chunks):
    # x_ref:   (tm, DIM)        row-tile of tokens (input dtype)
    # w13_ref: (DIM, 2*HIDDEN)  [w1^T | w3^T], bf16, VMEM-resident across the grid
    # w2_ref:  (HIDDEN, DIM)    w2^T, bf16, VMEM-resident across the grid
    x = x_ref[...].astype(jnp.bfloat16)

    if hidden_chunks == 1:
        # One fused MXU matmul for both projections (N = 1024, lane-dense).
        h13 = jnp.dot(x, w13_ref[...], preferred_element_type=jnp.float32)
        h1 = h13[:, :HIDDEN]
        h3 = h13[:, HIDDEN:]
        if gate_bf16:
            # v6e/v7x: bf16 VPU + EUP paths; halves the (tm, HIDDEN) intermediates.
            h1 = h1.astype(jnp.bfloat16)
            h3 = h3.astype(jnp.bfloat16)
        gated = ((h1 * jax.nn.sigmoid(h1)) * h3).astype(jnp.bfloat16)
        y = jnp.dot(gated, w2_ref[...], preferred_element_type=jnp.float32)
    else:
        # v5e path: chunk the hidden axis so live f32 intermediates stay small
        # and vector-store pressure (single vst slot) is reduced.  Each chunk is
        # a K=128/N=chunk matmul, a perfect fit for the 128x128 MXUs.
        hc = HIDDEN // hidden_chunks
        y = jnp.zeros((x.shape[0], DIM), jnp.float32)
        for c in range(hidden_chunks):
            lo = c * hc
            h1 = jnp.dot(x, w13_ref[:, lo:lo + hc],
                         preferred_element_type=jnp.float32)
            h3 = jnp.dot(x, w13_ref[:, HIDDEN + lo:HIDDEN + lo + hc],
                         preferred_element_type=jnp.float32)
            g = ((h1 * jax.nn.sigmoid(h1)) * h3).astype(jnp.bfloat16)
            y = y + jnp.dot(g, w2_ref[lo:lo + hc, :],
                            preferred_element_type=jnp.float32)

    o_ref[...] = y.astype(o_ref.dtype)


def prepare_weights(w1, w2, w3):
    """Fold the transpose / w1-w3 fusion / bf16 cast into the stored layout (once, at load).

    PyTorch nn.Linear stores weights as (out_features, in_features).
    """
    w13 = jnp.concatenate([w1.T, w3.T], axis=1).astype(jnp.bfloat16)  # (DIM, 2H)
    w2t = w2.T.astype(jnp.bfloat16)                                   # (H, DIM)
    return w13, w2t


@functools.partial(jax.jit, static_argnames=("tm_max",))
def nonlinear_forward(x, w13, w2t, *, tm_max=512):
    """x: (..., DIM).  w13: (DIM, 2*HIDDEN) bf16.  w2t: (HIDDEN, DIM) bf16."""
    if x.shape[-1] != DIM:
        raise ValueError(f"last dim of x must be {DIM}, got {x.shape}")
    orig_shape = x.shape
    xf = x.reshape(-1, DIM)          # free (contiguous last dim), no copy pass
    M = xf.shape[0]

    tm = _choose_tm(M, tm_max)
    grid_m = pl.cdiv(M, tm)          # ragged last block handled by Pallas masking

    gen = _tpu_generation()
    gate_bf16 = gen >= 6             # bf16 VPU/EUP on v6e/v7x
    hidden_chunks = 1 if gen >= 6 else 4

    cost = pl.CostEstimate(
        flops=2 * M * (DIM * FUSED + HIDDEN * DIM),
        transcendentals=M * HIDDEN,
        bytes_accessed=(xf.size * xf.dtype.itemsize
                        + w13.size * w13.dtype.itemsize
                        + w2t.size * w2t.dtype.itemsize
                        + M * DIM * xf.dtype.itemsize),
    )

    kernel = functools.partial(swiglu_kernel,
                               gate_bf16=gate_bf16,
                               hidden_chunks=hidden_chunks)

    out = pl.pallas_call(
        kernel,
        out_shape=jax.ShapeDtypeStruct((M, DIM), x.dtype),
        grid_spec=pltpu.PrefetchScalarGridSpec(
            num_scalar_prefetch=0,
            grid=(grid_m,),
            in_specs=[
                pl.BlockSpec((tm, DIM), lambda i: (i, 0)),     # x row-tile
                pl.BlockSpec((DIM, FUSED), lambda i: (0, 0)),  # [w1^T | w3^T], resident
                pl.BlockSpec((HIDDEN, DIM), lambda i: (0, 0)), # w2^T, resident
            ],
            out_specs=pl.BlockSpec((tm, DIM), lambda i: (i, 0)),
        ),
        compiler_params=pltpu.CompilerParams(
            dimension_semantics=("parallel",),      # megacore / 2-TC sharding of M
            vmem_limit_bytes=32 * 1024 * 1024,
        ),
        cost_estimate=cost,
    )(xf, w13, w2t)

    return out.reshape(orig_shape)


if __name__ == "__main__":
    key = jax.random.PRNGKey(0)
    kx, k1, k2, k3 = jax.random.split(key, 4)

    batch, seq = 2, 8
    x = jax.random.normal(kx, (batch, seq, DIM), dtype=jnp.float32)

    # Deterministic synthetic weights (PyTorch nn.Linear layout: (out, in)).
    scale = 0.02
    w1 = jax.random.normal(k1, (HIDDEN, DIM), dtype=jnp.float32) * scale
    w2 = jax.random.normal(k2, (DIM, HIDDEN), dtype=jnp.float32) * scale
    w3 = jax.random.normal(k3, (HIDDEN, DIM), dtype=jnp.float32) * scale

    w13, w2t = prepare_weights(w1, w2, w3)

    def ref(xx):  # pure-JAX f32 reference
        h1 = xx @ w1.T
        h3 = xx @ w3.T
        return (jax.nn.silu(h1) * h3) @ w2.T

    # Main check (tile-aligned token count).
    y = jax.block_until_ready(nonlinear_forward(x, w13, w2t))
    assert y.shape == x.shape
    err = float(jnp.max(jnp.abs(y - ref(x))))
    assert err < 2e-2, f"mismatch vs reference: max abs err {err}"

    # Ragged token count (M=15) exercises Pallas' masked last block (no host pad/slice).
    x2 = jax.random.normal(kx, (3, 5, DIM), dtype=jnp.float32)
    y2 = jax.block_until_ready(nonlinear_forward(x2, w13, w2t))
    err2 = float(jnp.max(jnp.abs(y2 - ref(x2))))
    assert err2 < 2e-2, f"ragged-M mismatch vs reference: max abs err {err2}"

    print("KERNEL_OK")
</pallas_src>

<mosaic_0001>
module attributes {stable_mosaic.version = 11 : i64} {
  func.func @swiglu_kernel(%arg0: i32, %arg1: memref<8x128xf32, #tpu.memory_space<vmem>>, %arg2: memref<128x1024xbf16, #tpu.memory_space<vmem>>, %arg3: memref<512x128xbf16, #tpu.memory_space<vmem>>, %arg4: memref<8x128xf32, #tpu.memory_space<vmem>>) attributes {dimension_semantics = [#tpu.dimension_semantics<parallel>], iteration_bounds = array<i64: 2>, scalar_prefetch = 0 : i64, scratch_operands = 0 : i64, tpu.core_type = #tpu.core_type<tc>, window_params = [{transform_indices = @transform_0, window_bounds = array<i64: 8, 128>}, {pipeline_mode = #tpu.pipeline_mode<synchronous>, transform_indices = @transform_1, window_bounds = array<i64: 128, 1024>}, {pipeline_mode = #tpu.pipeline_mode<synchronous>, transform_indices = @transform_2, window_bounds = array<i64: 512, 128>}, {transform_indices = @transform_3, window_bounds = array<i64: 8, 128>}]} {
    %c0 = arith.constant 0 : index
    %c0_0 = arith.constant 0 : index
    %0 = vector.load %arg1[%c0, %c0_0] : memref<8x128xf32, #tpu.memory_space<vmem>>, vector<8x128xf32>
    %1 = arith.truncf %0 : vector<8x128xf32> to vector<8x128xbf16>
    %c0_1 = arith.constant 0 : index
    %c0_2 = arith.constant 0 : index
    %2 = vector.load %arg2[%c0_1, %c0_2] : memref<128x1024xbf16, #tpu.memory_space<vmem>>, vector<128x1024xbf16>
    %cst = arith.constant dense<0.000000e+00> : vector<8x1024xf32>
    %3 = tpu.matmul %1, %2, %cst {dimension_numbers = #tpu.dot_dimension_numbers<[1], [0], [0], [1], [0, 0, 1, 1], [], []>} : vector<8x128xbf16>, vector<128x1024xbf16>, vector<8x1024xf32> -> vector<8x1024xf32>
    %4 = vector.extract_strided_slice %3 {offsets = [0, 0], sizes = [8, 512], strides = [1, 1]} : vector<8x1024xf32> to vector<8x512xf32>
    %5 = vector.extract_strided_slice %3 {offsets = [0, 512], sizes = [8, 512], strides = [1, 1]} : vector<8x1024xf32> to vector<8x512xf32>
    %6 = arith.truncf %4 : vector<8x512xf32> to vector<8x512xbf16>
    %7 = arith.truncf %5 : vector<8x512xf32> to vector<8x512xbf16>
    %8 = arith.negf %6 : vector<8x512xbf16>
    %9 = math.exp %8 : vector<8x512xbf16>
    %cst_3 = arith.constant 1.000000e+00 : bf16
    %10 = vector.broadcast %cst_3 : bf16 to vector<8x512xbf16>
    %11 = arith.addf %10, %9 : vector<8x512xbf16>
    %12 = arith.divf %10, %11 : vector<8x512xbf16>
    %13 = arith.mulf %6, %12 : vector<8x512xbf16>
    %14 = arith.mulf %13, %7 : vector<8x512xbf16>
    %c0_4 = arith.constant 0 : index
    %c0_5 = arith.constant 0 : index
    %15 = vector.load %arg3[%c0_4, %c0_5] : memref<512x128xbf16, #tpu.memory_space<vmem>>, vector<512x128xbf16>
    %cst_6 = arith.constant dense<0.000000e+00> : vector<8x128xf32>
    %16 = tpu.matmul %14, %15, %cst_6 {dimension_numbers = #tpu.dot_dimension_numbers<[1], [0], [0], [1], [0, 0, 1, 1], [], []>} : vector<8x512xbf16>, vector<512x128xbf16>, vector<8x128xf32> -> vector<8x128xf32>
    %c0_7 = arith.constant 0 : index
    %c0_8 = arith.constant 0 : index
    %17 = vector.load %arg4[%c0_7, %c0_8] : memref<8x128xf32, #tpu.memory_space<vmem>>, vector<8x128xf32>
    tpu.vector_store %arg4[%c0_7, %c0_8], %16 {strides = array<i32>} : memref<8x128xf32, #tpu.memory_space<vmem>>, vector<8x128xf32>,
    return
  }
  func.func @transform_0(%arg0: i32) -> (i32, i32) {
    %c0_i32 = arith.constant 0 : i32
    %c0_i32_0 = arith.constant 0 : i32
    return %arg0, %c0_i32 : i32, i32
  }
  func.func @transform_1(%arg0: i32) -> (i32, i32) {
    %c0_i32 = arith.constant 0 : i32
    %c0_i32_0 = arith.constant 0 : i32
    %c0_i32_1 = arith.constant 0 : i32
    return %c0_i32, %c0_i32_0 : i32, i32
  }
  func.func @transform_2(%arg0: i32) -> (i32, i32) {
    %c0_i32 = arith.constant 0 : i32
    %c0_i32_0 = arith.constant 0 : i32
    %c0_i32_1 = arith.constant 0 : i32
    return %c0_i32, %c0_i32_0 : i32, i32
  }
  func.func @transform_3(%arg0: i32) -> (i32, i32) {
    %c0_i32 = arith.constant 0 : i32
    %c0_i32_0 = arith.constant 0 : i32
    return %arg0, %c0_i32 : i32, i32
  }
}

</mosaic_0001>

<llo_original>
// kernel: nonlinear_forward.1
$region0: #{nonlinear_forward.1}
  #allocation0 [shape = 'u32[]', space=smem, size = 0x4, offset = 0x4, fixed_abs, tag = 'smem constant byte address 0x4 - core index']
  #allocation1 [shape = 'u32[144,128]{1,0:T(1,128)}', space=vmem, size = 0x12000, scoped, tag = 'internal scratch']
  %s0 = inlined_call_operand.hbm [shape: f32[16,128], index: 0, kind: input, shape index: {}]
  %s1 = inlined_call_operand.hbm [shape: bf16[128,1024], index: 1, kind: input, shape index: {}]
  %s2 = inlined_call_operand.hbm [shape: bf16[512,128], index: 2, kind: input, shape index: {}]
  %s3 = inlined_call_operand.hbm [shape: f32[16,128], index: 3, kind: output, shape index: {}]
  %s4 = sld [smem:[#allocation0]]
  $region57: #{nonlinear_forward.1} parent=0
    _
  %s6 = ssub.s32 1, %s4
  %s7 = scalar_select 0, %s6, %s4
  $region1: #{nonlinear_forward.1} parent=0
    #allocation2 [shape = 'u8[8192]{0}', space=vmem, size = 0x2000, scoped, tag = 'input window, operand 0']
    #allocation3 [shape = 's32[2]{0}', space=sflag, size = 0x8, scoped, tag = 'scoped memory for nonlinear_forward.1']
    #allocation4 [shape = 's32[2]{0}', space=sflag, size = 0x8, scoped, tag = 'scoped memory for nonlinear_forward.1']
    #allocation5 [shape = 'u8[262144]{0}', space=vmem, size = 0x40000, scoped, tag = 'input window, operand 1, single buffered']
    #allocation6 [shape = 's32[1]{0}', space=sflag, size = 0x4, scoped, tag = 'scoped memory for nonlinear_forward.1']
    #allocation7 [shape = 'u8[131072]{0}', space=vmem, size = 0x20000, scoped, tag = 'input window, operand 2, single buffered']
    #allocation8 [shape = 'u8[8192]{0}', space=vmem, size = 0x2000, scoped, tag = 'output window, operand 0']
    %8 = vsyncpa [#allocation3], 0
    %s9 = scalar_lea.sflag [#allocation3], 1
    %10 = vsyncpa %s9, 0
    %11 = vsyncpa [#allocation6], 0
    %12 = vsyncpa [#allocation4], 0
    %s13 = scalar_lea.sflag [#allocation4], 1
    %14 = vsyncpa %s13, 0
    loop: start=0, step=1, limit=4
    $region2: #{nonlinear_forward.1} parent=1 // loop_pre_header
      _
    $region3: #{nonlinear_forward.1} parent=1 // loop_header
      %s16 = sphi 0, %s20
      %p17 = scmp.ge.s32.totalorder %s16, 4
      %s26 = sphi 0, %s28
      %s29 = sphi 0, %s26
      %s30 = sphi 0, %s29
      %s46 = sphi 0, %s30
      %s50 = sphi 0, %s50
      %s52 = sphi 0, %s50
      %s53 = sphi 0, %s52
      %s67 = sphi 0, %s53
      %s71 = sphi 0, %s71
      %s73 = sphi 0, %s71
      %s74 = sphi 0, %s73
      %s88 = sphi 0, %s74
      %s94 = sphi 0, %s96
      %s97 = sphi 0, %s94
      %s98 = sphi 0, %s97
      %s114 = sphi 0, %s98
    $region4: #{nonlinear_forward.1} parent=1 // loop_header_branch
      %19 = sbr.rel (%p17) target = $region8
    $region5: #{nonlinear_forward.1} parent=1 // loop_body
      %s21 = ssub.s32 %s16, 1
      %s22 = ssub.s32 %s16, 2
      %s23 = sadd.s32 %s16, 1
      %s24 = ssub.s32 %s16, %s23
      %p25 = scmp.eq.s32.totalorder %s24, 0
      %s27 = sadd.s32 %s26, 1
      %s28 = scalar_select %p25, %s26, %s27
      %p31 = pneg %p25
      %p32 = scmp.eq.s32.totalorder %s16, 1
      %p33 = por %p31, %p32
      %p34 = scmp.ne.s32.totalorder %s26, %s29
      %p35 = scmp.eq.s32.totalorder %s16, 0
      %p36 = por %p34, %p35
      %p37 = scmp.ne.s32.totalorder %s26, %s29
      %p38 = scmp.eq.s32.totalorder %s21, 1
      %p39 = por %p37, %p38
      %p40 = scmp.ne.s32.totalorder %s29, %s30
      %p41 = scmp.eq.s32.totalorder %s21, 0
      %p42 = por %p40, %p41
      %p43 = scmp.ne.s32.totalorder %s29, %s30
      %p44 = scmp.eq.s32.totalorder %s22, 1
      %p45 = por %p43, %p44
      %p47 = scmp.ne.s32.totalorder %s30, %s46
      %p48 = scmp.eq.s32.totalorder %s22, 0
      %p49 = por %p47, %p48
      %s51 = sadd.s32 %s50, 1
      %p54 = scmp.eq.s32.totalorder %s16, 1
      %p55 = scmp.ne.s32.totalorder %s50, %s52
      %p56 = scmp.eq.s32.totalorder %s16, 0
      %p57 = por %p55, %p56
      %p58 = scmp.ne.s32.totalorder %s50, %s52
      %p59 = scmp.eq.s32.totalorder %s21, 1
      %p60 = por %p58, %p59
      %p61 = scmp.ne.s32.totalorder %s52, %s53
      %p62 = scmp.eq.s32.totalorder %s21, 0
      %p63 = por %p61, %p62
      %p64 = scmp.ne.s32.totalorder %s52, %s53
      %p65 = scmp.eq.s32.totalorder %s22, 1
      %p66 = por %p64, %p65
      %p68 = scmp.ne.s32.totalorder %s53, %s67
      %p69 = scmp.eq.s32.totalorder %s22, 0
      %p70 = por %p68, %p69
      %s72 = sadd.s32 %s71, 1
      %p75 = scmp.eq.s32.totalorder %s16, 1
      %p76 = scmp.ne.s32.totalorder %s71, %s73
      %p77 = scmp.eq.s32.totalorder %s16, 0
      %p78 = por %p76, %p77
      %p79 = scmp.ne.s32.totalorder %s71, %s73
      %p80 = scmp.eq.s32.totalorder %s21, 1
      %p81 = por %p79, %p80
      %p82 = scmp.ne.s32.totalorder %s73, %s74
      %p83 = scmp.eq.s32.totalorder %s21, 0
      %p84 = por %p82, %p83
      %p85 = scmp.ne.s32.totalorder %s73, %s74
      %p86 = scmp.eq.s32.totalorder %s22, 1
      %p87 = por %p85, %p86
      %p89 = scmp.ne.s32.totalorder %s74, %s88
      %p90 = scmp.eq.s32.totalorder %s22, 0
      %p91 = por %p89, %p90
      %s92 = ssub.s32 %s16, %s23
      %p93 = scmp.eq.s32.totalorder %s92, 0
      %s95 = sadd.s32 %s94, 1
      %s96 = scalar_select %p93, %s94, %s95
      %p99 = pneg %p93
      %p100 = scmp.eq.s32.totalorder %s16, 1
      %p101 = por %p99, %p100
      %p102 = scmp.ne.s32.totalorder %s94, %s97
      %p103 = scmp.eq.s32.totalorder %s16, 0
      %p104 = por %p102, %p103
      %p105 = scmp.ne.s32.totalorder %s94, %s97
      %p106 = scmp.eq.s32.totalorder %s21, 1
      %p107 = por %p105, %p106
      %p108 = scmp.ne.s32.totalorder %s97, %s98
      %p109 = scmp.eq.s32.totalorder %s21, 0
      %p110 = por %p108, %p109
      %p111 = scmp.ne.s32.totalorder %s97, %s98
      %p112 = scmp.eq.s32.totalorder %s22, 1
      %p113 = por %p111, %p112
      %p115 = scmp.ne.s32.totalorder %s98, %s114
      %p116 = scmp.eq.s32.totalorder %s22, 0
      %p117 = por %p115, %p116
      %p118 = scmp.le.s32.totalorder 1, %s16
      %p119 = scmp.lt.s32.totalorder %s16, 3
      %p120 = pnand %p118, %p119
      %p121 = pneg %p120
      // Predicated region
      $region9: #{nonlinear_forward.1} parent=5 // pred_check
        _
      $region10: #{nonlinear_forward.1} parent=5 // pred_check_branch
        %123 = sbr.rel (%p120) target = $region12
      $region11: #{nonlinear_forward.1} parent=5 // pred_region
        %s124 = ssub.s32 %s16, 1
        // Predicated region
        $region13: #{nonlinear_forward.1} parent=11 // pred_check
          %p125 = pneg %p63
        $region14: #{nonlinear_forward.1} parent=11 // pred_check_branch
          %127 = sbr.rel (%p125) target = $region16
        $region15: #{nonlinear_forward.1} parent=11 // pred_region
          %s129 = ssub.s32 8192, 8192
          %130 = vsyncadd [#allocation6], %s129
          %s131 = sshll.u32 [#allocation5], 4
          %s132 = int_to_ptr.vmem [resolvable:$true] %s131
          %137 = dma.hbm_to_vmem [thread:$0]  %s1, 8192, %s132, [#allocation6], 512, 512, 32
        $region16: #{nonlinear_forward.1} parent=11 // pred_fallthru
          _
        // Predicated region
        $region17: #{nonlinear_forward.1} parent=11 // pred_check
          %p138 = pneg %p84
        $region18: #{nonlinear_forward.1} parent=11 // pred_check_branch
          %140 = sbr.rel (%p138) target = $region20
        $region19: #{nonlinear_forward.1} parent=11 // pred_region
          %s142 = ssub.s32 4096, 4096
          %143 = vsyncadd [#allocation6], %s142
          %s144 = sshll.u32 [#allocation7], 4
          %s145 = int_to_ptr.vmem [resolvable:$true] %s144
          %150 = dma.hbm_to_vmem [thread:$0]  %s2, 4096, %s145, [#allocation6], 64, 64, 4
        $region20: #{nonlinear_forward.1} parent=11 // pred_fallthru
          _
      $region12: #{nonlinear_forward.1} parent=5 // pred_fallthru
        _
      %p151 = scmp.lt.s32.totalorder %s16, 2
      // Predicated region
      $region21: #{nonlinear_forward.1} parent=5 // pred_check
        %p152 = pneg %p151
      $region22: #{nonlinear_forward.1} parent=5 // pred_check_branch
        %154 = sbr.rel (%p152) target = $region24
      $region23: #{nonlinear_forward.1} parent=5 // pred_region
        // Predicated region
        $region25: #{nonlinear_forward.1} parent=23 // pred_check
          %p155 = pneg %p36
        $region26: #{nonlinear_forward.1} parent=23 // pred_check_branch
          %157 = sbr.rel (%p155) target = $region28
        $region27: #{nonlinear_forward.1} parent=23 // pred_region
          %s158 = sand.u32 %s26, 1
          %s159 = scalar_lea.sflag [#allocation3], %s158
          %s160 = sand.u32 %s26, 1
          %s161 = smul.addr %s160, 8
          %s162 = scalar_lea.vmem [#allocation2], %s161
          %s164 = ssub.s32 128, 128
          %165 = vsyncadd %s159, %s164
          %s166 = smul.addr %s16, 128
          %s167 = scalar_lea.hbm %s0, %s166
          %s169 = sshll.u32 %s162, 4
          %s170 = int_to_ptr.vmem [resolvable:$true] %s169
          %172 = dma.hbm_to_vmem [thread:$0]  %s167, 128, %s170, %s159
        $region28: #{nonlinear_forward.1} parent=23 // pred_fallthru
          _
      $region24: #{nonlinear_forward.1} parent=5 // pred_fallthru
        _
      %p173 = scmp.le.s32.totalorder 1, %s16
      %p174 = scmp.lt.s32.totalorder %s16, 3
      %p175 = pnand %p173, %p174
      %p176 = pneg %p175
      // Predicated region
      $region29: #{nonlinear_forward.1} parent=5 // pred_check
        _
      $region30: #{nonlinear_forward.1} parent=5 // pred_check_branch
        %178 = sbr.rel (%p175) target = $region32
      $region31: #{nonlinear_forward.1} parent=5 // pred_region
        %s179 = ssub.s32 %s16, 1
        %s180 = sand.u32 %s29, 1
        %s181 = scalar_lea.sflag [#allocation3], %s180
        %s182 = sand.u32 %s29, 1
        %s183 = smul.addr %s182, 8
        %s184 = scalar_lea.vmem [#allocation2], %s183
        // Predicated region
        $region33: #{nonlinear_forward.1} parent=31 // pred_check
          %p185 = pneg %p42
        $region34: #{nonlinear_forward.1} parent=31 // pred_check_branch
          %187 = sbr.rel (%p185) target = $region36
        $region35: #{nonlinear_forward.1} parent=31 // pred_region
          %188 = dma.done %s181, 128
        $region36: #{nonlinear_forward.1} parent=31 // pred_fallthru
          _
        // Predicated region
        $region37: #{nonlinear_forward.1} parent=31 // pred_check
          %p189 = pneg %p63
        $region38: #{nonlinear_forward.1} parent=31 // pred_check_branch
          %191 = sbr.rel (%p189) target = $region40
        $region39: #{nonlinear_forward.1} parent=31 // pred_region
          %192 = dma.done [#allocation6], 8192
        $region40: #{nonlinear_forward.1} parent=31 // pred_fallthru
          _
        // Predicated region
        $region41: #{nonlinear_forward.1} parent=31 // pred_check
          %p193 = pneg %p84
        $region42: #{nonlinear_forward.1} parent=31 // pred_check_branch
          %195 = sbr.rel (%p193) target = $region44
        $region43: #{nonlinear_forward.1} parent=31 // pred_region
          %196 = dma.done [#allocation6], 4096
        $region44: #{nonlinear_forward.1} parent=31 // pred_fallthru
          _
        %s197 = sand.u32 %s29, 1
        %s198 = scalar_lea.sflag [#allocation3], %s197
        %s199 = sand.u32 %s29, 1
        %s200 = smul.addr %s199, 8
        %s201 = scalar_lea.vmem [#allocation2], %s200
        %p202 = pneg %p42
        %p203 = pneg %p39
        %p204 = pneg %p63
        %p205 = pneg %p60
        %p206 = pneg %p84
        %p207 = pneg %p81
        %p208 = pneg %p110
        %p209 = pneg %p107
        %s210 = sand.u32 %s97, 1
        %s211 = scalar_lea.sflag [#allocation4], %s210
        %s212 = sand.u32 %s97, 1
        %s213 = smul.addr %s212, 8
        %s214 = scalar_lea.vmem [#allocation8], %s213
        %v217 = vld [vmem:[%s184] sm:$0xff]
        %v218 = vpack.c.bf16 %v217, %v217
        %v219 = vld [vmem:[#allocation5] sm:$0xff]
        %v220 = vld [vmem:[#allocation5 + $0x8] sm:$0xff]
        %v221 = vld [vmem:[#allocation5 + $0x10] sm:$0xff]
        %v222 = vld [vmem:[#allocation5 + $0x18] sm:$0xff]
        %v223 = vld [vmem:[#allocation5 + $0x20] sm:$0xff]
        %v224 = vld [vmem:[#allocation5 + $0x28] sm:$0xff]
        %v225 = vld [vmem:[#allocation5 + $0x30] sm:$0xff]
        %v226 = vld [vmem:[#allocation5 + $0x38] sm:$0xff]
        %v227 = vld [vmem:[#allocation5 + $0x40] sm:$0xff]
        %v228 = vld [vmem:[#allocation5 + $0x48] sm:$0xff]
        %v229 = vld [vmem:[#allocation5 + $0x50] sm:$0xff]
        %v230 = vld [vmem:[#allocation5 + $0x58] sm:$0xff]
        %v231 = vld [vmem:[#allocation5 + $0x60] sm:$0xff]
        %v232 = vld [vmem:[#allocation5 + $0x68] sm:$0xff]
        %v233 = vld [vmem:[#allocation5 + $0x70] sm:$0xff]
        %v234 = vld [vmem:[#allocation5 + $0x78] sm:$0xff]
        %v235 = vld [vmem:[#allocation5 + $0x80] sm:$0xff]
        %v236 = vld [vmem:[#allocation5 + $0x88] sm:$0xff]
        %v237 = vld [vmem:[#allocation5 + $0x90] sm:$0xff]
        %v238 = vld [vmem:[#allocation5 + $0x98] sm:$0xff]
        %v239 = vld [vmem:[#allocation5 + $0xa0] sm:$0xff]
        %v240 = vld [vmem:[#allocation5 + $0xa8] sm:$0xff]
        %v241 = vld [vmem:[#allocation5 + $0xb0] sm:$0xff]
        %v242 = vld [vmem:[#allocation5 + $0xb8] sm:$0xff]
        %v243 = vld [vmem:[#allocation5 + $0xc0] sm:$0xff]
        %v244 = vld [vmem:[#allocation5 + $0xc8] sm:$0xff]
        %v245 = vld [vmem:[#allocation5 + $0xd0] sm:$0xff]
        %v246 = vld [vmem:[#allocation5 + $0xd8] sm:$0xff]
        %v247 = vld [vmem:[#allocation5 + $0xe0] sm:$0xff]
        %v248 = vld [vmem:[#allocation5 + $0xe8] sm:$0xff]
        %v249 = vld [vmem:[#allocation5 + $0xf0] sm:$0xff]
        %v250 = vld [vmem:[#allocation5 + $0xf8] sm:$0xff]
        %v251 = vld [vmem:[#allocation5 + $0x100] sm:$0xff]
        %v252 = vld [vmem:[#allocation5 + $0x108] sm:$0xff]
        %v253 = vld [vmem:[#allocation5 + $0x110] sm:$0xff]
        %v254 = vld [vmem:[#allocation5 + $0x118] sm:$0xff]
        %v255 = vld [vmem:[#allocation5 + $0x120] sm:$0xff]
        %v256 = vld [vmem:[#allocation5 + $0x128] sm:$0xff]
        %v257 = vld [vmem:[#allocation5 + $0x130] sm:$0xff]
        %v258 = vld [vmem:[#allocation5 + $0x138] sm:$0xff]
        %v259 = vld [vmem:[#allocation5 + $0x140] sm:$0xff]
        %v260 = vld [vmem:[#allocation5 + $0x148] sm:$0xff]
        %v261 = vld [vmem:[#allocation5 + $0x150] sm:$0xff]
        %v262 = vld [vmem:[#allocation5 + $0x158] sm:$0xff]
        %v263 = vld [vmem:[#allocation5 + $0x160] sm:$0xff]
        %v264 = vld [vmem:[#allocation5 + $0x168] sm:$0xff]
        %v265 = vld [vmem:[#allocation5 + $0x170] sm:$0xff]
        %v266 = vld [vmem:[#allocation5 + $0x178] sm:$0xff]
        %v267 = vld [vmem:[#allocation5 + $0x180] sm:$0xff]
        %v268 = vld [vmem:[#allocation5 + $0x188] sm:$0xff]
        %v269 = vld [vmem:[#allocation5 + $0x190] sm:$0xff]
        %v270 = vld [vmem:[#allocation5 + $0x198] sm:$0xff]
        %v271 = vld [vmem:[#allocation5 + $0x1a0] sm:$0xff]
        %v272 = vld [vmem:[#allocation5 + $0x1a8] sm:$0xff]
        %v273 = vld [vmem:[#allocation5 + $0x1b0] sm:$0xff]
        %v274 = vld [vmem:[#allocation5 + $0x1b8] sm:$0xff]
        %v275 = vld [vmem:[#allocation5 + $0x1c0] sm:$0xff]
        %v276 = vld [vmem:[#allocation5 + $0x1c8] sm:$0xff]
        %v277 = vld [vmem:[#allocation5 + $0x1d0] sm:$0xff]
        %v278 = vld [vmem:[#allocation5 + $0x1d8] sm:$0xff]
        %v279 = vld [vmem:[#allocation5 + $0x1e0] sm:$0xff]
        %v280 = vld [vmem:[#allocation5 + $0x1e8] sm:$0xff]
        %v281 = vld [vmem:[#allocation5 + $0x1f0] sm:$0xff]
        %v282 = vld [vmem:[#allocation5 + $0x1f8] sm:$0xff]
        %v347 = vunpack.c.l.b16 %v219
        %v348 = vunpack.c.h.b16 %v219
        %v349 = vunpack.c.l.b16 %v220
        %v350 = vunpack.c.h.b16 %v220
        %v351 = vunpack.c.l.b16 %v221
        %v352 = vunpack.c.h.b16 %v221
        %v353 = vunpack.c.l.b16 %v222
        %v354 = vunpack.c.h.b16 %v222
        %v355 = vunpack.c.l.b16 %v223
        %v356 = vunpack.c.h.b16 %v223
        %v357 = vunpack.c.l.b16 %v224
        %v358 = vunpack.c.h.b16 %v224
        %v359 = vunpack.c.l.b16 %v225
        %v360 = vunpack.c.h.b16 %v225
        %v361 = vunpack.c.l.b16 %v226
        %v362 = vunpack.c.h.b16 %v226
        %v363 = vunpack.c.l.b16 %v227
        %v364 = vunpack.c.h.b16 %v227
        %v365 = vunpack.c.l.b16 %v228
        %v366 = vunpack.c.h.b16 %v228
        %v367 = vunpack.c.l.b16 %v229
        %v368 = vunpack.c.h.b16 %v229
        %v369 = vunpack.c.l.b16 %v230
        %v370 = vunpack.c.h.b16 %v230
        %v371 = vunpack.c.l.b16 %v231
        %v372 = vunpack.c.h.b16 %v231
        %v373 = vunpack.c.l.b16 %v232
        %v374 = vunpack.c.h.b16 %v232
        %v375 = vunpack.c.l.b16 %v233
        %v376 = vunpack.c.h.b16 %v233
        %v377 = vunpack.c.l.b16 %v234
        %v378 = vunpack.c.h.b16 %v234
        %v379 = vunpack.c.l.b16 %v235
        %v380 = vunpack.c.h.b16 %v235
        %v381 = vunpack.c.l.b16 %v236
        %v382 = vunpack.c.h.b16 %v236
        %v383 = vunpack.c.l.b16 %v237
        %v384 = vunpack.c.h.b16 %v237
        %v385 = vunpack.c.l.b16 %v238
        %v386 = vunpack.c.h.b16 %v238
        %v387 = vunpack.c.l.b16 %v239
        %v388 = vunpack.c.h.b16 %v239
        %v389 = vunpack.c.l.b16 %v240
        %v390 = vunpack.c.h.b16 %v240
        %v391 = vunpack.c.l.b16 %v241
        %v392 = vunpack.c.h.b16 %v241
        %v393 = vunpack.c.l.b16 %v242
        %v394 = vunpack.c.h.b16 %v242
        %v395 = vunpack.c.l.b16 %v243
        %v396 = vunpack.c.h.b16 %v243
        %v397 = vunpack.c.l.b16 %v244
        %v398 = vunpack.c.h.b16 %v244
        %v399 = vunpack.c.l.b16 %v245
        %v400 = vunpack.c.h.b16 %v245
        %v401 = vunpack.c.l.b16 %v246
        %v402 = vunpack.c.h.b16 %v246
        %v403 = vunpack.c.l.b16 %v247
        %v404 = vunpack.c.h.b16 %v247
        %v405 = vunpack.c.l.b16 %v248
        %v406 = vunpack.c.h.b16 %v248
        %v407 = vunpack.c.l.b16 %v249
        %v408 = vunpack.c.h.b16 %v249
        %v409 = vunpack.c.l.b16 %v250
        %v410 = vunpack.c.h.b16 %v250
        %v411 = vunpack.c.l.b16 %v251
        %v412 = vunpack.c.h.b16 %v251
        %v413 = vunpack.c.l.b16 %v252
        %v414 = vunpack.c.h.b16 %v252
        %v415 = vunpack.c.l.b16 %v253
        %v416 = vunpack.c.h.b16 %v253
        %v417 = vunpack.c.l.b16 %v254
        %v418 = vunpack.c.h.b16 %v254
        %v419 = vunpack.c.l.b16 %v255
        %v420 = vunpack.c.h.b16 %v255
        %v421 = vunpack.c.l.b16 %v256
        %v422 = vunpack.c.h.b16 %v256
        %v423 = vunpack.c.l.b16 %v257
        %v424 = vunpack.c.h.b16 %v257
        %v425 = vunpack.c.l.b16 %v258
        %v426 = vunpack.c.h.b16 %v258
        %v427 = vunpack.c.l.b16 %v259
        %v428 = vunpack.c.h.b16 %v259
        %v429 = vunpack.c.l.b16 %v260
        %v430 = vunpack.c.h.b16 %v260
        %v431 = vunpack.c.l.b16 %v261
        %v432 = vunpack.c.h.b16 %v261
        %v433 = vunpack.c.l.b16 %v262
        %v434 = vunpack.c.h.b16 %v262
        %v435 = vunpack.c.l.b16 %v263
        %v436 = vunpack.c.h.b16 %v263
        %v437 = vunpack.c.l.b16 %v264
        %v438 = vunpack.c.h.b16 %v264
        %v439 = vunpack.c.l.b16 %v265
        %v440 = vunpack.c.h.b16 %v265
        %v441 = vunpack.c.l.b16 %v266
        %v442 = vunpack.c.h.b16 %v266
        %v443 = vunpack.c.l.b16 %v267
        %v444 = vunpack.c.h.b16 %v267
        %v445 = vunpack.c.l.b16 %v268
        %v446 = vunpack.c.h.b16 %v268
        %v447 = vunpack.c.l.b16 %v269
        %v448 = vunpack.c.h.b16 %v269
        %v449 = vunpack.c.l.b16 %v270
        %v450 = vunpack.c.h.b16 %v270
        %v451 = vunpack.c.l.b16 %v271
        %v452 = vunpack.c.h.b16 %v271
        %v453 = vunpack.c.l.b16 %v272
        %v454 = vunpack.c.h.b16 %v272
        %v455 = vunpack.c.l.b16 %v273
        %v456 = vunpack.c.h.b16 %v273
        %v457 = vunpack.c.l.b16 %v274
        %v458 = vunpack.c.h.b16 %v274
        %v459 = vunpack.c.l.b16 %v275
        %v460 = vunpack.c.h.b16 %v275
        %v461 = vunpack.c.l.b16 %v276
        %v462 = vunpack.c.h.b16 %v276
        %v463 = vunpack.c.l.b16 %v277
        %v464 = vunpack.c.h.b16 %v277
        %v465 = vunpack.c.l.b16 %v278
        %v466 = vunpack.c.h.b16 %v278
        %v467 = vunpack.c.l.b16 %v279
        %v468 = vunpack.c.h.b16 %v279
        %v469 = vunpack.c.l.b16 %v280
        %v470 = vunpack.c.h.b16 %v280
        %v471 = vunpack.c.l.b16 %v281
        %v472 = vunpack.c.h.b16 %v281
        %v473 = vunpack.c.l.b16 %v282
        %v474 = vunpack.c.h.b16 %v282
        %v475 = vpack.c.b16 %v355, %v347
        %v476 = vpack.c.b16 %v356, %v348
        %v477 = vpack.c.b16 %v357, %v349
        %v478 = vpack.c.b16 %v358, %v350
        %v479 = vpack.c.b16 %v359, %v351
        %v480 = vpack.c.b16 %v360, %v352
        %v481 = vpack.c.b16 %v361, %v353
        %v482 = vpack.c.b16 %v362, %v354
        %v483 = vpack.c.b16 %v371, %v363
        %v484 = vpack.c.b16 %v372, %v364
        %v485 = vpack.c.b16 %v373, %v365
        %v486 = vpack.c.b16 %v374, %v366
        %v487 = vpack.c.b16 %v375, %v367
        %v488 = vpack.c.b16 %v376, %v368
        %v489 = vpack.c.b16 %v377, %v369
        %v490 = vpack.c.b16 %v378, %v370
        %v491 = vpack.c.b16 %v387, %v379
        %v492 = vpack.c.b16 %v388, %v380
        %v493 = vpack.c.b16 %v389, %v381
        %v494 = vpack.c.b16 %v390, %v382
        %v495 = vpack.c.b16 %v391, %v383
        %v496 = vpack.c.b16 %v392, %v384
        %v497 = vpack.c.b16 %v393, %v385
        %v498 = vpack.c.b16 %v394, %v386
        %v499 = vpack.c.b16 %v403, %v395
        %v500 = vpack.c.b16 %v404, %v396
        %v501 = vpack.c.b16 %v405, %v397
        %v502 = vpack.c.b16 %v406, %v398
        %v503 = vpack.c.b16 %v407, %v399
        %v504 = vpack.c.b16 %v408, %v400
        %v505 = vpack.c.b16 %v409, %v401
        %v506 = vpack.c.b16 %v410, %v402
        %v507 = vpack.c.b16 %v419, %v411
        %v508 = vpack.c.b16 %v420, %v412
        %v509 = vpack.c.b16 %v421, %v413
        %v510 = vpack.c.b16 %v422, %v414
        %v511 = vpack.c.b16 %v423, %v415
        %v512 = vpack.c.b16 %v424, %v416
        %v513 = vpack.c.b16 %v425, %v417
        %v514 = vpack.c.b16 %v426, %v418
        %v515 = vpack.c.b16 %v435, %v427
        %v516 = vpack.c.b16 %v436, %v428
        %v517 = vpack.c.b16 %v437, %v429
        %v518 = vpack.c.b16 %v438, %v430
        %v519 = vpack.c.b16 %v439, %v431
        %v520 = vpack.c.b16 %v440, %v432
        %v521 = vpack.c.b16 %v441, %v433
        %v522 = vpack.c.b16 %v442, %v434
        %v523 = vpack.c.b16 %v451, %v443
        %v524 = vpack.c.b16 %v452, %v444
        %v525 = vpack.c.b16 %v453, %v445
        %v526 = vpack.c.b16 %v454, %v446
        %v527 = vpack.c.b16 %v455, %v447
        %v528 = vpack.c.b16 %v456, %v448
        %v529 = vpack.c.b16 %v457, %v449
        %v530 = vpack.c.b16 %v458, %v450
        %v531 = vpack.c.b16 %v467, %v459
        %v532 = vpack.c.b16 %v468, %v460
        %v533 = vpack.c.b16 %v469, %v461
        %v534 = vpack.c.b16 %v470, %v462
        %v535 = vpack.c.b16 %v471, %v463
        %v536 = vpack.c.b16 %v472, %v464
        %v537 = vpack.c.b16 %v473, %v465
        %v538 = vpack.c.b16 %v474, %v466
        %603 = vmatprep.subr.bf16.mxu0 %v476
        %604 = vmatpush1.bf16.msra.mxu0 %v475
        %605 = vmatprep.subr.bf16.mxu0 %v484
        %606 = vmatpush1.bf16.msra.mxu0 %v483
        %607 = vmatprep.subr.bf16.mxu0 %v492
        %608 = vmatpush1.bf16.msra.mxu0 %v491
        %609 = vmatprep.subr.bf16.mxu0 %v500
        %610 = vmatpush1.bf16.msra.mxu0 %v499
        %611 = vmatprep.subr.bf16.mxu0 %v508
        %612 = vmatpush1.bf16.msra.mxu0 %v507
        %613 = vmatprep.subr.bf16.mxu0 %v516
        %614 = vmatpush1.bf16.msra.mxu0 %v515
        %615 = vmatprep.subr.bf16.mxu0 %v524
        %616 = vmatpush1.bf16.msra.mxu0 %v523
        %617 = vmatprep.subr.bf16.mxu0 %v532
        %618 = vmatpush1.bf16.msra.mxu0 %v531
        %619 = vmatprep.subr.bf16.mxu0 0
        %620 = vmatpush1.bf16.msra.mxu0 0
        %621 = vmatprep.subr.bf16.mxu0 0
        %622 = vmatpush1.bf16.msra.mxu0 0
        %623 = vmatprep.subr.bf16.mxu0 0
        %624 = vmatpush1.bf16.msra.mxu0 0
        %625 = vmatprep.subr.bf16.mxu0 0
        %626 = vmatpush1.bf16.msra.mxu0 0
        %627 = vmatprep.subr.bf16.mxu0 0
        %628 = vmatpush1.bf16.msra.mxu0 0
        %629 = vmatprep.subr.bf16.mxu0 0
        %630 = vmatpush1.bf16.msra.mxu0 0
        %631 = vmatprep.subr.bf16.mxu0 0
        %632 = vmatpush1.bf16.msra.mxu0 0
        %633 = vmatprep.subr.bf16.mxu0 0
        %634 = vmatpush1.bf16.msra.mxu0 0
        %635 = vmatprep.mubr.bf16.mxu0 0
        %636 = vmatmul.mubr.bf16.gmra.mrb[0].mxu0 %v218
        %v637 = vpop.f32.mrb[0].mxu0
        %v638 = vadd.f32 0.0, %v637
        %v639 = vpop.f32.mrb[0].mxu0
        %v640 = vadd.f32 0.0, %v639
        %v641 = vpop.f32.mrb[0].mxu0
        %v642 = vpop.f32.mrb[0].mxu0
        %643 = vdwg.mxu0
        %644 = vmatprep.subr.bf16.mxu0 %v478
        %645 = vmatpush1.bf16.msra.mxu0 %v477
        %646 = vmatprep.subr.bf16.mxu0 %v486
        %647 = vmatpush1.bf16.msra.mxu0 %v485
        %648 = vmatprep.subr.bf16.mxu0 %v494
        %649 = vmatpush1.bf16.msra.mxu0 %v493
        %650 = vmatprep.subr.bf16.mxu0 %v502
        %651 = vmatpush1.bf16.msra.mxu0 %v501
        %652 = vmatprep.subr.bf16.mxu0 %v510
        %653 = vmatpush1.bf16.msra.mxu0 %v509
        %654 = vmatprep.subr.bf16.mxu0 %v518
        %655 = vmatpush1.bf16.msra.mxu0 %v517
        %656 = vmatprep.subr.bf16.mxu0 %v526
        %657 = vmatpush1.bf16.msra.mxu0 %v525
        %658 = vmatprep.subr.bf16.mxu0 %v534
        %659 = vmatpush1.bf16.msra.mxu0 %v533
        %660 = vmatprep.subr.bf16.mxu0 0
        %661 = vmatpush1.bf16.msra.mxu0 0
        %662 = vmatprep.subr.bf16.mxu0 0
        %663 = vmatpush1.bf16.msra.mxu0 0
        %664 = vmatprep.subr.bf16.mxu0 0
        %665 = vmatpush1.bf16.msra.mxu0 0
        %666 = vmatprep.subr.bf16.mxu0 0
        %667 = vmatpush1.bf16.msra.mxu0 0
        %668 = vmatprep.subr.bf16.mxu0 0
        %669 = vmatpush1.bf16.msra.mxu0 0
        %670 = vmatprep.subr.bf16.mxu0 0
        %671 = vmatpush1.bf16.msra.mxu0 0
        %672 = vmatprep.subr.bf16.mxu0 0
        %673 = vmatpush1.bf16.msra.mxu0 0
        %674 = vmatprep.subr.bf16.mxu0 0
        %675 = vmatpush1.bf16.msra.mxu0 0
        %676 = vmatprep.mubr.bf16.mxu0 0
        %677 = vmatmul.mubr.bf16.gmra.mrb[0].mxu0 %v218
        %v678 = vpop.f32.mrb[0].mxu0
        %v679 = vadd.f32 0.0, %v678
        %v680 = vpop.f32.mrb[0].mxu0
        %v681 = vadd.f32 0.0, %v680
        %v682 = vpop.f32.mrb[0].mxu0
        %v683 = vpop.f32.mrb[0].mxu0
        %684 = vdwg.mxu0
        %685 = vmatprep.subr.bf16.mxu0 %v480
        %686 = vmatpush1.bf16.msra.mxu0 %v479
        %687 = vmatprep.subr.bf16.mxu0 %v488
        %688 = vmatpush1.bf16.msra.mxu0 %v487
        %689 = vmatprep.subr.bf16.mxu0 %v496
        %690 = vmatpush1.bf16.msra.mxu0 %v495
        %691 = vmatprep.subr.bf16.mxu0 %v504
        %692 = vmatpush1.bf16.msra.mxu0 %v503
        %693 = vmatprep.subr.bf16.mxu0 %v512
        %694 = vmatpush1.bf16.msra.mxu0 %v511
        %695 = vmatprep.subr.bf16.mxu0 %v520
        %696 = vmatpush1.bf16.msra.mxu0 %v519
        %697 = vmatprep.subr.bf16.mxu0 %v528
        %698 = vmatpush1.bf16.msra.mxu0 %v527
        %699 = vmatprep.subr.bf16.mxu0 %v536
        %700 = vmatpush1.bf16.msra.mxu0 %v535
        %701 = vmatprep.subr.bf16.mxu0 0
        %702 = vmatpush1.bf16.msra.mxu0 0
        %703 = vmatprep.subr.bf16.mxu0 0
        %704 = vmatpush1.bf16.msra.mxu0 0
        %705 = vmatprep.subr.bf16.mxu0 0
        %706 = vmatpush1.bf16.msra.mxu0 0
        %707 = vmatprep.subr.bf16.mxu0 0
        %708 = vmatpush1.bf16.msra.mxu0 0
        %709 = vmatprep.subr.bf16.mxu0 0
        %710 = vmatpush1.bf16.msra.mxu0 0
        %711 = vmatprep.subr.bf16.mxu0 0
        %712 = vmatpush1.bf16.msra.mxu0 0
        %713 = vmatprep.subr.bf16.mxu0 0
        %714 = vmatpush1.bf16.msra.mxu0 0
        %715 = vmatprep.subr.bf16.mxu0 0
        %716 = vmatpush1.bf16.msra.mxu0 0
        %717 = vmatprep.mubr.bf16.mxu0 0
        %718 = vmatmul.mubr.bf16.gmra.mrb[0].mxu0 %v218
        %v719 = vpop.f32.mrb[0].mxu0
        %v720 = vadd.f32 0.0, %v719
        %v721 = vpop.f32.mrb[0].mxu0
        %v722 = vadd.f32 0.0, %v721
        %v723 = vpop.f32.mrb[0].mxu0
        %v724 = vpop.f32.mrb[0].mxu0
        %725 = vdwg.mxu0
        %726 = vmatprep.subr.bf16.mxu0 %v482
        %727 = vmatpush1.bf16.msra.mxu0 %v481
        %728 = vmatprep.subr.bf16.mxu0 %v490
        %729 = vmatpush1.bf16.msra.mxu0 %v489
        %730 = vmatprep.subr.bf16.mxu0 %v498
        %731 = vmatpush1.bf16.msra.mxu0 %v497
        %732 = vmatprep.subr.bf16.mxu0 %v506
        %733 = vmatpush1.bf16.msra.mxu0 %v505
        %734 = vmatprep.subr.bf16.mxu0 %v514
        %735 = vmatpush1.bf16.msra.mxu0 %v513
        %736 = vmatprep.subr.bf16.mxu0 %v522
        %737 = vmatpush1.bf16.msra.mxu0 %v521
        %738 = vmatprep.subr.bf16.mxu0 %v530
        %739 = vmatpush1.bf16.msra.mxu0 %v529
        %740 = vmatprep.subr.bf16.mxu0 %v538
        %741 = vmatpush1.bf16.msra.mxu0 %v537
        %742 = vmatprep.subr.bf16.mxu0 0
        %743 = vmatpush1.bf16.msra.mxu0 0
        %744 = vmatprep.subr.bf16.mxu0 0
        %745 = vmatpush1.bf16.msra.mxu0 0
        %746 = vmatprep.subr.bf16.mxu0 0
        %747 = vmatpush1.bf16.msra.mxu0 0
        %748 = vmatprep.subr.bf16.mxu0 0
        %749 = vmatpush1.bf16.msra.mxu0 0
        %750 = vmatprep.subr.bf16.mxu0 0
        %751 = vmatpush1.bf16.msra.mxu0 0
        %752 = vmatprep.subr.bf16.mxu0 0
        %753 = vmatpush1.bf16.msra.mxu0 0
        %754 = vmatprep.subr.bf16.mxu0 0
        %755 = vmatpush1.bf16.msra.mxu0 0
        %756 = vmatprep.subr.bf16.mxu0 0
        %757 = vmatpush1.bf16.msra.mxu0 0
        %758 = vmatprep.mubr.bf16.mxu0 0
        %759 = vmatmul.mubr.bf16.gmra.mrb[0].mxu0 %v218
        %v760 = vpop.f32.mrb[0].mxu0
        %v761 = vadd.f32 0.0, %v760
        %v762 = vpop.f32.mrb[0].mxu0
        %v763 = vadd.f32 0.0, %v762
        %v764 = vpop.f32.mrb[0].mxu0
        %v765 = vpop.f32.mrb[0].mxu0
        %766 = vdwg.mxu0
        %v767 = vpack.c.bf16 %v638, %v638
        %v768 = vpack.c.bf16 %v640, %v640
        %v769 = vpack.c.bf16 %v679, %v679
        %v770 = vpack.c.bf16 %v681, %v681
        %v771 = vpack.c.bf16 %v720, %v720
        %v772 = vpack.c.bf16 %v722, %v722
        %v773 = vpack.c.bf16 %v761, %v761
        %v774 = vpack.c.bf16 %v763, %v763
        %v775 = vxor.u32 %v767, 2147516416
        %v776 = vxor.u32 %v768, 2147516416
        %v777 = vxor.u32 %v769, 2147516416
        %v778 = vxor.u32 %v770, 2147516416
        %v780 = vmul.bf16 %v775, 1069105081
        %v781 = vpow.bf16.pop %v780
        %v783 = vmul.bf16 %v776, 1069105081
        %v784 = vpow.bf16.pop %v783
        %v786 = vmul.bf16 %v777, 1069105081
        %v787 = vpow.bf16.pop %v786
        %v789 = vmul.bf16 %v778, 1069105081
        %v790 = vpow.bf16.pop %v789
        %v791 = vadd.bf16 %v781, 1065369472
        %v792 = vadd.bf16 %v784, 1065369472
        %v793 = vadd.bf16 %v787, 1065369472
        %v794 = vadd.bf16 %v790, 1065369472
        %v795 = vrcp.bf16.pop %v791
        %v796 = vmul.bf16 1065369472, %v795
        %v797 = vrcp.bf16.pop %v792
        %v798 = vmul.bf16 1065369472, %v797
        %v799 = vrcp.bf16.pop %v793
        %v800 = vmul.bf16 1065369472, %v799
        %v801 = vrcp.bf16.pop %v794
        %v802 = vmul.bf16 1065369472, %v801
        %v803 = vmul.bf16 %v767, %v796
        %v804 = vmul.bf16 %v768, %v798
        %v805 = vmul.bf16 %v769, %v800
        %v806 = vmul.bf16 %v770, %v802
        %v807 = vmul.bf16 %v803, %v771
        %v808 = vmul.bf16 %v804, %v772
        %v809 = vmul.bf16 %v805, %v773
        %v810 = vmul.bf16 %v806, %v774
        %v811 = vld [vmem:[#allocation7] sm:$0xf]
        %v812 = vld [vmem:[#allocation7 + $0x4] sm:$0xf]
        %v813 = vld [vmem:[#allocation7 + $0x8] sm:$0xf]
        %v814 = vld [vmem:[#allocation7 + $0xc] sm:$0xf]
        %v815 = vld [vmem:[#allocation7 + $0x10] sm:$0xf]
        %v816 = vld [vmem:[#allocation7 + $0x14] sm:$0xf]
        %v817 = vld [vmem:[#allocation7 + $0x18] sm:$0xf]
        %v818 = vld [vmem:[#allocation7 + $0x1c] sm:$0xf]
        %v819 = vld [vmem:[#allocation7 + $0x20] sm:$0xf]
        %v820 = vld [vmem:[#allocation7 + $0x24] sm:$0xf]
        %v821 = vld [vmem:[#allocation7 + $0x28] sm:$0xf]
        %v822 = vld [vmem:[#allocation7 + $0x2c] sm:$0xf]
        %v823 = vld [vmem:[#allocation7 + $0x30] sm:$0xf]
        %v824 = vld [vmem:[#allocation7 + $0x34] sm:$0xf]
        %v825 = vld [vmem:[#allocation7 + $0x38] sm:$0xf]
        %v826 = vld [vmem:[#allocation7 + $0x3c] sm:$0xf]
        %v827 = vld [vmem:[#allocation7 + $0x40] sm:$0xf]
        %v828 = vld [vmem:[#allocation7 + $0x44] sm:$0xf]
        %v829 = vld [vmem:[#allocation7 + $0x48] sm:$0xf]
        %v830 = vld [vmem:[#allocation7 + $0x4c] sm:$0xf]
        %v831 = vld [vmem:[#allocation7 + $0x50] sm:$0xf]
        %v832 = vld [vmem:[#allocation7 + $0x54] sm:$0xf]
        %v833 = vld [vmem:[#allocation7 + $0x58] sm:$0xf]
        %v834 = vld [vmem:[#allocation7 + $0x5c] sm:$0xf]
        %v835 = vld [vmem:[#allocation7 + $0x60] sm:$0xf]
        %v836 = vld [vmem:[#allocation7 + $0x64] sm:$0xf]
        %v837 = vld [vmem:[#allocation7 + $0x68] sm:$0xf]
        %v838 = vld [vmem:[#allocation7 + $0x6c] sm:$0xf]
        %v839 = vld [vmem:[#allocation7 + $0x70] sm:$0xf]
        %v840 = vld [vmem:[#allocation7 + $0x74] sm:$0xf]
        %v841 = vld [vmem:[#allocation7 + $0x78] sm:$0xf]
        %v842 = vld [vmem:[#allocation7 + $0x7c] sm:$0xf]
        %v843 = vld [vmem:[#allocation7 + $0x80] sm:$0xf]
        %v844 = vld [vmem:[#allocation7 + $0x84] sm:$0xf]
        %v845 = vld [vmem:[#allocation7 + $0x88] sm:$0xf]
        %v846 = vld [vmem:[#allocation7 + $0x8c] sm:$0xf]
        %v847 = vld [vmem:[#allocation7 + $0x90] sm:$0xf]
        %v848 = vld [vmem:[#allocation7 + $0x94] sm:$0xf]
        %v849 = vld [vmem:[#allocation7 + $0x98] sm:$0xf]
        %v850 = vld [vmem:[#allocation7 + $0x9c] sm:$0xf]
        %v851 = vld [vmem:[#allocation7 + $0xa0] sm:$0xf]
        %v852 = vld [vmem:[#allocation7 + $0xa4] sm:$0xf]
        %v853 = vld [vmem:[#allocation7 + $0xa8] sm:$0xf]
        %v854 = vld [vmem:[#allocation7 + $0xac] sm:$0xf]
        %v855 = vld [vmem:[#allocation7 + $0xb0] sm:$0xf]
        %v856 = vld [vmem:[#allocation7 + $0xb4] sm:$0xf]
        %v857 = vld [vmem:[#allocation7 + $0xb8] sm:$0xf]
        %v858 = vld [vmem:[#allocation7 + $0xbc] sm:$0xf]
        %v859 = vld [vmem:[#allocation7 + $0xc0] sm:$0xf]
        %v860 = vld [vmem:[#allocation7 + $0xc4] sm:$0xf]
        %v861 = vld [vmem:[#allocation7 + $0xc8] sm:$0xf]
        %v862 = vld [vmem:[#allocation7 + $0xcc] sm:$0xf]
        %v863 = vld [vmem:[#allocation7 + $0xd0] sm:$0xf]
        %v864 = vld [vmem:[#allocation7 + $0xd4] sm:$0xf]
        %v865 = vld [vmem:[#allocation7 + $0xd8] sm:$0xf]
        %v866 = vld [vmem:[#allocation7 + $0xdc] sm:$0xf]
        %v867 = vld [vmem:[#allocation7 + $0xe0] sm:$0xf]
        %v868 = vld [vmem:[#allocation7 + $0xe4] sm:$0xf]
        %v869 = vld [vmem:[#allocation7 + $0xe8] sm:$0xf]
        %v870 = vld [vmem:[#allocation7 + $0xec] sm:$0xf]
        %v871 = vld [vmem:[#allocation7 + $0xf0] sm:$0xf]
        %v872 = vld [vmem:[#allocation7 + $0xf4] sm:$0xf]
        %v873 = vld [vmem:[#allocation7 + $0xf8] sm:$0xf]
        %v874 = vld [vmem:[#allocation7 + $0xfc] sm:$0xf]
        %v939 = vunpack.c.l.b16 %v811
        %v940 = vunpack.c.l.b16 %v812
        %v941 = vunpack.c.l.b16 %v813
        %v942 = vunpack.c.l.b16 %v814
        %v943 = vunpack.c.l.b16 %v815
        %v944 = vunpack.c.l.b16 %v816
        %v945 = vunpack.c.l.b16 %v817
        %v946 = vunpack.c.l.b16 %v818
        %v947 = vunpack.c.l.b16 %v819
        %v948 = vunpack.c.l.b16 %v820
        %v949 = vunpack.c.l.b16 %v821
        %v950 = vunpack.c.l.b16 %v822
        %v951 = vunpack.c.l.b16 %v823
        %v952 = vunpack.c.l.b16 %v824
        %v953 = vunpack.c.l.b16 %v825
        %v954 = vunpack.c.l.b16 %v826
        %v955 = vunpack.c.l.b16 %v827
        %v956 = vunpack.c.l.b16 %v828
        %v957 = vunpack.c.l.b16 %v829
        %v958 = vunpack.c.l.b16 %v830
        %v959 = vunpack.c.l.b16 %v831
        %v960 = vunpack.c.l.b16 %v832
        %v961 = vunpack.c.l.b16 %v833
        %v962 = vunpack.c.l.b16 %v834
        %v963 = vunpack.c.l.b16 %v835
        %v964 = vunpack.c.l.b16 %v836
        %v965 = vunpack.c.l.b16 %v837
        %v966 = vunpack.c.l.b16 %v838
        %v967 = vunpack.c.l.b16 %v839
        %v968 = vunpack.c.l.b16 %v840
        %v969 = vunpack.c.l.b16 %v841
        %v970 = vunpack.c.l.b16 %v842
        %v971 = vunpack.c.l.b16 %v843
        %v972 = vunpack.c.l.b16 %v844
        %v973 = vunpack.c.l.b16 %v845
        %v974 = vunpack.c.l.b16 %v846
        %v975 = vunpack.c.l.b16 %v847
        %v976 = vunpack.c.l.b16 %v848
        %v977 = vunpack.c.l.b16 %v849
        %v978 = vunpack.c.l.b16 %v850
        %v979 = vunpack.c.l.b16 %v851
        %v980 = vunpack.c.l.b16 %v852
        %v981 = vunpack.c.l.b16 %v853
        %v982 = vunpack.c.l.b16 %v854
        %v983 = vunpack.c.l.b16 %v855
        %v984 = vunpack.c.l.b16 %v856
        %v985 = vunpack.c.l.b16 %v857
        %v986 = vunpack.c.l.b16 %v858
        %v987 = vunpack.c.l.b16 %v859
        %v988 = vunpack.c.l.b16 %v860
        %v989 = vunpack.c.l.b16 %v861
        %v990 = vunpack.c.l.b16 %v862
        %v991 = vunpack.c.l.b16 %v863
        %v992 = vunpack.c.l.b16 %v864
        %v993 = vunpack.c.l.b16 %v865
        %v994 = vunpack.c.l.b16 %v866
        %v995 = vunpack.c.l.b16 %v867
        %v996 = vunpack.c.l.b16 %v868
        %v997 = vunpack.c.l.b16 %v869
        %v998 = vunpack.c.l.b16 %v870
        %v999 = vunpack.c.l.b16 %v871
        %v1000 = vunpack.c.l.b16 %v872
        %v1001 = vunpack.c.l.b16 %v873
        %v1002 = vunpack.c.l.b16 %v874
        %v1003 = vpack.c.b16 %v940, %v939
        %v1004 = vpack.c.b16 %v942, %v941
        %v1005 = vpack.c.b16 %v944, %v943
        %v1006 = vpack.c.b16 %v946, %v945
        %v1007 = vpack.c.b16 %v948, %v947
        %v1008 = vpack.c.b16 %v950, %v949
        %v1009 = vpack.c.b16 %v952, %v951
        %v1010 = vpack.c.b16 %v954, %v953
        %v1011 = vpack.c.b16 %v956, %v955
        %v1012 = vpack.c.b16 %v958, %v957
        %v1013 = vpack.c.b16 %v960, %v959
        %v1014 = vpack.c.b16 %v962, %v961
        %v1015 = vpack.c.b16 %v964, %v963
        %v1016 = vpack.c.b16 %v966, %v965
        %v1017 = vpack.c.b16 %v968, %v967
        %v1018 = vpack.c.b16 %v970, %v969
        %v1019 = vpack.c.b16 %v972, %v971
        %v1020 = vpack.c.b16 %v974, %v973
        %v1021 = vpack.c.b16 %v976, %v975
        %v1022 = vpack.c.b16 %v978, %v977
        %v1023 = vpack.c.b16 %v980, %v979
        %v1024 = vpack.c.b16 %v982, %v981
        %v1025 = vpack.c.b16 %v984, %v983
        %v1026 = vpack.c.b16 %v986, %v985
        %v1027 = vpack.c.b16 %v988, %v987
        %v1028 = vpack.c.b16 %v990, %v989
        %v1029 = vpack.c.b16 %v992, %v991
        %v1030 = vpack.c.b16 %v994, %v993
        %v1031 = vpack.c.b16 %v996, %v995
        %v1032 = vpack.c.b16 %v998, %v997
        %v1033 = vpack.c.b16 %v1000, %v999
        %v1034 = vpack.c.b16 %v1002, %v1001
        %1067 = vmatprep.subr.bf16.mxu0 0
        %1068 = vmatpush1.bf16.msra.mxu0 %v1003
        %1069 = vmatprep.subr.bf16.mxu0 0
        %1070 = vmatpush1.bf16.msra.mxu0 %v1004
        %1071 = vmatprep.subr.bf16.mxu0 0
        %1072 = vmatpush1.bf16.msra.mxu0 %v1005
        %1073 = vmatprep.subr.bf16.mxu0 0
        %1074 = vmatpush1.bf16.msra.mxu0 %v1006
        %1075 = vmatprep.subr.bf16.mxu0 0
        %1076 = vmatpush1.bf16.msra.mxu0 %v1007
        %1077 = vmatprep.subr.bf16.mxu0 0
        %1078 = vmatpush1.bf16.msra.mxu0 %v1008
        %1079 = vmatprep.subr.bf16.mxu0 0
        %1080 = vmatpush1.bf16.msra.mxu0 %v1009
        %1081 = vmatprep.subr.bf16.mxu0 0
        %1082 = vmatpush1.bf16.msra.mxu0 %v1010
        %1083 = vmatprep.subr.bf16.mxu0 0
        %1084 = vmatpush1.bf16.msra.mxu0 %v1011
        %1085 = vmatprep.subr.bf16.mxu0 0
        %1086 = vmatpush1.bf16.msra.mxu0 %v1012
        %1087 = vmatprep.subr.bf16.mxu0 0
        %1088 = vmatpush1.bf16.msra.mxu0 %v1013
        %1089 = vmatprep.subr.bf16.mxu0 0
        %1090 = vmatpush1.bf16.msra.mxu0 %v1014
        %1091 = vmatprep.subr.bf16.mxu0 0
        %1092 = vmatpush1.bf16.msra.mxu0 %v1015
        %1093 = vmatprep.subr.bf16.mxu0 0
        %1094 = vmatpush1.bf16.msra.mxu0 %v1016
        %1095 = vmatprep.subr.bf16.mxu0 0
        %1096 = vmatpush1.bf16.msra.mxu0 %v1017
        %1097 = vmatprep.subr.bf16.mxu0 0
        %1098 = vmatpush1.bf16.msra.mxu0 %v1018
        %1099 = vmatprep.mubr.bf16.mxu0 %v808
        %1100 = vmatmul.mubr.bf16.gmra.mrb[0].mxu0 %v807
        %v1101 = vpop.f32.mrb[0].mxu0
        %v1102 = vadd.f32 0.0, %v1101
        %v1103 = vpop.f32.mrb[0].mxu0
        %v1104 = vpop.f32.mrb[0].mxu0
        %v1105 = vpop.f32.mrb[0].mxu0
        %1106 = vdwg.mxu0
        %1107 = vmatprep.subr.bf16.mxu0 0
        %1108 = vmatpush1.bf16.msra.mxu0 %v1019
        %1109 = vmatprep.subr.bf16.mxu0 0
        %1110 = vmatpush1.bf16.msra.mxu0 %v1020
        %1111 = vmatprep.subr.bf16.mxu0 0
        %1112 = vmatpush1.bf16.msra.mxu0 %v1021
        %1113 = vmatprep.subr.bf16.mxu0 0
        %1114 = vmatpush1.bf16.msra.mxu0 %v1022
        %1115 = vmatprep.subr.bf16.mxu0 0
        %1116 = vmatpush1.bf16.msra.mxu0 %v1023
        %1117 = vmatprep.subr.bf16.mxu0 0
        %1118 = vmatpush1.bf16.msra.mxu0 %v1024
        %1119 = vmatprep.subr.bf16.mxu0 0
        %1120 = vmatpush1.bf16.msra.mxu0 %v1025
        %1121 = vmatprep.subr.bf16.mxu0 0
        %1122 = vmatpush1.bf16.msra.mxu0 %v1026
        %1123 = vmatprep.subr.bf16.mxu0 0
        %1124 = vmatpush1.bf16.msra.mxu0 %v1027
        %1125 = vmatprep.subr.bf16.mxu0 0
        %1126 = vmatpush1.bf16.msra.mxu0 %v1028
        %1127 = vmatprep.subr.bf16.mxu0 0
        %1128 = vmatpush1.bf16.msra.mxu0 %v1029
        %1129 = vmatprep.subr.bf16.mxu0 0
        %1130 = vmatpush1.bf16.msra.mxu0 %v1030
        %1131 = vmatprep.subr.bf16.mxu0 0
        %1132 = vmatpush1.bf16.msra.mxu0 %v1031
        %1133 = vmatprep.subr.bf16.mxu0 0
        %1134 = vmatpush1.bf16.msra.mxu0 %v1032
        %1135 = vmatprep.subr.bf16.mxu0 0
        %1136 = vmatpush1.bf16.msra.mxu0 %v1033
        %1137 = vmatprep.subr.bf16.mxu0 0
        %1138 = vmatpush1.bf16.msra.mxu0 %v1034
        %1139 = vmatprep.mubr.bf16.mxu0 %v810
        %1140 = vmatmul.mubr.bf16.gmra.mrb[0].mxu0 %v809
        %v1141 = vpop.f32.mrb[0].mxu0
        %v1142 = vadd.f32 %v1102, %v1141
        %v1143 = vpop.f32.mrb[0].mxu0
        %v1144 = vpop.f32.mrb[0].mxu0
        %v1145 = vpop.f32.mrb[0].mxu0
        %1146 = vdwg.mxu0
        %1147 = vst [vmem:[%s214] sm:$0xff] %v1142
        %s1148 = sand.u32 %s97, 1
        %s1149 = scalar_lea.sflag [#allocation4], %s1148
        %s1150 = sand.u32 %s97, 1
        %s1151 = smul.addr %s1150, 8
        %s1152 = scalar_lea.vmem [#allocation8], %s1151
        // Predicated region
        $region45: #{nonlinear_forward.1} parent=31 // pred_check
          %p1153 = pneg %p107
        $region46: #{nonlinear_forward.1} parent=31 // pred_check_branch
          %1155 = sbr.rel (%p1153) target = $region48
        $region47: #{nonlinear_forward.1} parent=31 // pred_region
          %s1157 = ssub.s32 128, 128
          %1158 = vsyncadd %s1149, %s1157
          %s1159 = smul.addr %s21, 128
          %s1160 = scalar_lea.hbm %s3, %s1159
          %s1162 = sshll.u32 %s1152, 4
          %s1163 = int_to_ptr.vmem [resolvable:$true] %s1162
          %1165 = dma.vmem_to_hbm [thread:$0]  %s1163, 128, %s1160, %s1149
        $region48: #{nonlinear_forward.1} parent=31 // pred_fallthru
          _
      $region32: #{nonlinear_forward.1} parent=5 // pred_fallthru
        _
      %p1166 = scmp.le.s32.totalorder 2, %s16
      // Predicated region
      $region49: #{nonlinear_forward.1} parent=5 // pred_check
        %p1167 = pneg %p1166
      $region50: #{nonlinear_forward.1} parent=5 // pred_check_branch
        %1169 = sbr.rel (%p1167) target = $region52
      $region51: #{nonlinear_forward.1} parent=5 // pred_region
        %s1170 = ssub.s32 %s16, 2
        // Predicated region
        $region53: #{nonlinear_forward.1} parent=51 // pred_check
          %p1171 = pneg %p113
        $region54: #{nonlinear_forward.1} parent=51 // pred_check_branch
          %1173 = sbr.rel (%p1171) target = $region56
        $region55: #{nonlinear_forward.1} parent=51 // pred_region
          %s1174 = sand.u32 %s98, 1
          %s1175 = scalar_lea.sflag [#allocation4], %s1174
          %s1176 = sand.u32 %s98, 1
          %s1177 = smul.addr %s1176, 8
          %s1178 = scalar_lea.vmem [#allocation8], %s1177
          %1179 = dma.done %s1175, 128
        $region56: #{nonlinear_forward.1} parent=51 // pred_fallthru
          _
      $region52: #{nonlinear_forward.1} parent=5 // pred_fallthru
        _
    $region6: #{nonlinear_forward.1} parent=1 // loop_footer
      %s20 = sadd.s32 1, %s16
    $region7: #{nonlinear_forward.1} parent=1 // loop_footer_branch
      %15 = sbr.rel target = $region3
    $region8: #{nonlinear_forward.1} parent=1 // loop_exit
      _
    %1180 = vsyncpa [#allocation3], 1
    %s1181 = scalar_lea.sflag [#allocation3], 1
    %1182 = vsyncpa %s1181, 1
    %1183 = vsyncpa [#allocation6], 1
    %1184 = vsyncpa [#allocation4], 1
    %s1185 = scalar_lea.sflag [#allocation4], 1
    %1186 = vsyncpa %s1185, 1

</llo_original>
